<compile_context>
chip_gen: v6e
topology: v6e:2x2x1
jax: 0.10.0
libtpu: 0.0.40
codegen_flags: <defaults>
</compile_context>

<pallas_src>
import functools
import re

import jax
import jax.numpy as jnp
from jax import lax
from jax.experimental import pallas as pl
from jax.experimental.pallas import tpu as pltpu

LANE = 128


def _round_up(x, m):
    return ((x + m - 1) // m) * m


def _tpu_generation():
    """Best-effort TPU generation (5, 6, 7, ...) from device_kind; 0 if unknown."""
    try:
        kind = jax.devices()[0].device_kind
    except Exception:
        return 0
    m = re.search(r"(\d+)", kind)
    return int(m.group(1)) if m else 0


def _choose_tiles(batch, gen):
    """Batch tile TB and padded batch B_p, generation aware."""
    b8 = _round_up(max(batch, 1), 8)
    max_tb = 256 if gen >= 6 else 128          # v6e/v7x: 2x256 MXU; v5e: native 128
    tb = min(max_tb, b8)
    if gen >= 7 and b8 >= 16:
        # Split into >=2 grid steps so the 'parallel' axis shards across both TCs.
        tb = min(tb, _round_up(-(-b8 // 2), 8))
    b_p = _round_up(b8, tb)
    return tb, b_p


# ----------------------------- Pallas head kernel -----------------------------

def cbm_head_kernel(feat_ref, wfc_ref, wattr_ref, wint_ref, wfin_ref, bias_ref,
                    logits_ref, concepts_ref, *, l_p, a_p, c_p):
    bias = bias_ref[...]                                       # (8, Nmax) f32

    # base_model.fc + ReLU  (bf16 operands, f32 accumulation); cast to bf16 once
    # after the ReLU and drop the f32 copy (narrow live range).
    h = jnp.dot(feat_ref[...], wfc_ref[...], preferred_element_type=jnp.float32)
    h = jnp.maximum(h + bias[0:1, :l_p], 0.0).astype(jnp.bfloat16)
    # TODO(synk): dropout(p=0.2) is eval-mode identity; training-mode masking
    # via pltpu.prng_* is not emitted.

    # attribute (concept bottleneck) classifier — returned without activation.
    concepts = (jnp.dot(h, wattr_ref[...], preferred_element_type=jnp.float32)
                + bias[1:2, :a_p])
    concepts_ref[...] = concepts

    # attribute_activation_function='sigmoid', hard=False (defaults).
    # Padded concept columns give sigmoid(0)=0.5, but the matching zero rows of
    # the zero-padded intermediary weight cancel them out.
    xs = jax.nn.sigmoid(concepts).astype(jnp.bfloat16)

    # two_layers=True (default): intermediary classifier + ReLU.
    xi = (jnp.dot(xs, wint_ref[...], preferred_element_type=jnp.float32)
          + bias[2:3, :a_p])
    xi = jnp.maximum(xi, 0.0).astype(jnp.bfloat16)

    # final classifier (no softmax, as in the reference).
    logits_ref[...] = (jnp.dot(xi, wfin_ref[...], preferred_element_type=jnp.float32)
                       + bias[3:4, :c_p])


# ----------------------- One-time head parameter prep -------------------------

def prepare_cbm_head(head_params, gen=None):
    """Pad / cast the head weights once (call OUTSIDE jit; results are cached
    on device and reused for every forward call)."""
    if gen is None:
        gen = _tpu_generation()
    wfc, bfc, wattr, battr, wint, bint, wfin, bfin = head_params
    feat_dim, n_lin = wfc.shape
    n_attr = wattr.shape[1]
    n_classes = wfin.shape[1]

    def lane_pad(n):
        # 256-lane padding only on v6e/v7x and only when the dim exceeds 128
        # (real CUB sizes); v5e / small dims keep native 128.
        unit = 256 if (gen >= 6 and n > 128) else LANE
        return _round_up(n, unit)

    l_p, a_p, c_p = lane_pad(n_lin), lane_pad(n_attr), lane_pad(n_classes)
    n_max = max(l_p, a_p, c_p)

    def padw(w, rows, cols):
        return jnp.pad(w, ((0, rows - w.shape[0]), (0, cols - w.shape[1]))
                       ).astype(jnp.bfloat16)

    # Pack the four bias vectors into a single sublane-aligned (8, Nmax) block.
    bias = jnp.zeros((8, n_max), jnp.float32)
    bias = bias.at[0, :n_lin].set(bfc.reshape(-1))
    bias = bias.at[1, :n_attr].set(battr.reshape(-1))
    bias = bias.at[2, :n_attr].set(bint.reshape(-1))
    bias = bias.at[3, :n_classes].set(bfin.reshape(-1))

    prep = {
        'wfc':  padw(wfc, feat_dim, l_p),   # K (feat dim) left unpadded on purpose
        'wattr': padw(wattr, l_p, a_p),
        # wint's padded rows MUST stay exactly zero (sigmoid(0)=0.5 cancellation).
        'wint': padw(wint, a_p, a_p),
        'wfin': padw(wfin, a_p, c_p),
        'bias': bias,
    }
    logical = {'n_lin': n_lin, 'n_attr': n_attr, 'n_classes': n_classes}
    return prep, logical


def cbm_head(feat, prep, *, n_lin, n_attr, n_classes):
    gen = _tpu_generation()
    B, F = feat.shape
    wfc, wattr, wint, wfin, bias = (prep['wfc'], prep['wattr'], prep['wint'],
                                    prep['wfin'], prep['bias'])
    l_p, a_p, c_p = wfc.shape[1], wattr.shape[1], wfin.shape[1]
    n_max = bias.shape[1]

    TB, B_p = _choose_tiles(B, gen)

    # Only per-call work on the activation path: bf16 cast + batch pad of feat
    # (lane dim stays at its full logical width F -> no lane padding needed).
    feat_p = feat.astype(jnp.bfloat16)
    if B_p != B:
        feat_p = jnp.pad(feat_p, ((0, B_p - B), (0, 0)))

    grid = (B_p // TB,)
    const = lambda i: (0, 0)
    kernel = functools.partial(cbm_head_kernel, l_p=l_p, a_p=a_p, c_p=c_p)

    # Advisory cost estimate from LOGICAL (unpadded) shapes.
    logical_flops = 2 * B * (F * n_lin + n_lin * n_attr
                             + n_attr * n_attr + n_attr * n_classes)
    logical_bytes = (B * F * 4
                     + (F * n_lin + n_lin * n_attr + n_attr * n_attr
                        + n_attr * n_classes) * 2
                     + (n_lin + 2 * n_attr + n_classes) * 4
                     + B * (n_attr + n_classes) * 4)

    logits_p, concepts_p = pl.pallas_call(
        kernel,
        out_shape=(jax.ShapeDtypeStruct((B_p, c_p), jnp.float32),
                   jax.ShapeDtypeStruct((B_p, a_p), jnp.float32)),
        grid=grid,
        in_specs=[pl.BlockSpec((TB, F), lambda i: (i, 0)),
                  pl.BlockSpec((F, l_p), const),      # constant index_map: no
                  pl.BlockSpec((l_p, a_p), const),    # re-DMA across grid steps
                  pl.BlockSpec((a_p, a_p), const),
                  pl.BlockSpec((a_p, c_p), const),
                  pl.BlockSpec((8, n_max), const)],
        out_specs=(pl.BlockSpec((TB, c_p), lambda i: (i, 0)),
                   pl.BlockSpec((TB, a_p), lambda i: (i, 0))),
        compiler_params=pltpu.CompilerParams(
            dimension_semantics=("parallel",)),
        cost_estimate=pl.CostEstimate(
            flops=logical_flops,
            transcendentals=B * n_attr,
            bytes_accessed=logical_bytes),
    )(feat_p, wfc, wattr, wint, wfin, bias)

    return logits_p[:B, :n_classes], concepts_p[:B, :n_attr]


# ------------------------ ResNet18-style backbone (JAX) ------------------------

STAGE_STRIDES = (1, 2, 2, 2)   # static — must NOT live inside the traced params


def conv2d(x, w, stride, padding):
    # x: NHWC, w: HWIO; stride/padding are Python ints (static).
    return lax.conv_general_dilated(
        x, w, window_strides=(stride, stride),
        padding=[(padding, padding), (padding, padding)],
        dimension_numbers=('NHWC', 'HWIO', 'NHWC'))


def batchnorm(x, p):
    gamma, beta, mean, var = p
    return (x - mean) * gamma * lax.rsqrt(var + 1e-5) + beta


def basic_block(x, p, stride):
    identity = x
    out = conv2d(x, p['conv1'], stride=stride, padding=1)
    out = jnp.maximum(batchnorm(out, p['bn1']), 0.0)
    out = conv2d(out, p['conv2'], stride=1, padding=1)
    out = batchnorm(out, p['bn2'])
    if 'ds_conv' in p:
        identity = batchnorm(conv2d(x, p['ds_conv'], stride=stride, padding=0),
                             p['ds_bn'])
    return jnp.maximum(out + identity, 0.0)


def backbone_forward(params, x_nchw):
    x = jnp.transpose(x_nchw, (0, 2, 3, 1))          # NCHW -> NHWC
    x = conv2d(x, params['conv1'], stride=2, padding=3)
    x = jnp.maximum(batchnorm(x, params['bn1']), 0.0)
    x = lax.reduce_window(x, -jnp.inf, lax.max,
                          (1, 3, 3, 1), (1, 2, 2, 1),
                          [(0, 0), (1, 1), (1, 1), (0, 0)])
    for stage_blocks, stage_stride in zip(params['stages'], STAGE_STRIDES):
        for bi, block in enumerate(stage_blocks):
            x = basic_block(x, block, stride=stage_stride if bi == 0 else 1)
    feat = jnp.mean(x, axis=(1, 2))                   # adaptive avg-pool -> [B, C]
    return feat


# ------------------------------- Param init -----------------------------------

class KeyGen:
    def __init__(self, key):
        self.key = key

    def __call__(self):
        self.key, sub = jax.random.split(self.key)
        return sub


def _bn_init(c):
    # matches fresh nn.BatchNorm2d: gamma=1, beta=0, running_mean=0, running_var=1
    return (jnp.ones((c,), jnp.float32), jnp.zeros((c,), jnp.float32),
            jnp.zeros((c,), jnp.float32), jnp.ones((c,), jnp.float32))


def init_params(key, widths=(8, 16, 32, 64),
                n_linear_output=32, n_attr=16, n_classes=24):
    kg = KeyGen(key)
    nrm = lambda shape, s=0.05: s * jax.random.normal(kg(), shape, jnp.float32)

    backbone = {
        'conv1': nrm((7, 7, 3, widths[0])),
        'bn1': _bn_init(widths[0]),
        'stages': [],
    }
    in_c = widths[0]
    for i, w in enumerate(widths):
        stride = STAGE_STRIDES[i]
        blocks = []
        for bi in range(2):
            s = stride if bi == 0 else 1
            b_in = in_c if bi == 0 else w
            blk = {
                'conv1': nrm((3, 3, b_in, w)),
                'bn1': _bn_init(w),
                'conv2': nrm((3, 3, w, w)),
                'bn2': _bn_init(w),
            }
            if s != 1 or b_in != w:
                blk['ds_conv'] = nrm((1, 1, b_in, w))
                blk['ds_bn'] = _bn_init(w)
            blocks.append(blk)
        backbone['stages'].append(blocks)        # no stride key inside params
        in_c = w

    feat_dim = widths[-1]
    # Linear weights stored as [in, out] (transposed PyTorch layout); biases as [1, out]
    head = (
        nrm((feat_dim, n_linear_output)), nrm((1, n_linear_output)),   # base_model.fc
        nrm((n_linear_output, n_attr)),   nrm((1, n_attr)),            # attribute_classifier
        nrm((n_attr, n_attr)),            nrm((1, n_attr)),            # intermediary_classifier
        nrm((n_attr, n_classes)),         nrm((1, n_classes)),         # final_classifier
    )
    return backbone, head


# ------------------------------- Full forward ----------------------------------

def cub_cbm_forward(backbone_params, prep_head, x_nchw, *, n_lin, n_attr, n_classes):
    feat = backbone_forward(backbone_params, x_nchw)
    logits, concepts = cbm_head(feat, prep_head,
                                n_lin=n_lin, n_attr=n_attr, n_classes=n_classes)
    return logits, concepts


if __name__ == "__main__":
    key = jax.random.PRNGKey(0)
    k_param, k_x = jax.random.split(key)

    # Small, module-consistent shapes: batch=2, 3-channel 32x32 images,
    # scaled-down widths, n_linear_output=32, n_attr=16, n_classes=24.
    backbone_params, head_params = init_params(k_param)
    x = jax.random.normal(k_x, (2, 3, 32, 32), jnp.float32)

    # One-time (cached) padding / bf16 cast / bias packing of the head params.
    prep_head, logical = prepare_cbm_head(head_params)

    fwd = jax.jit(functools.partial(cub_cbm_forward, **logical))
    logits, concepts = fwd(backbone_params, prep_head, x)
    jax.block_until_ready((logits, concepts))

    assert logits.shape == (2, 24) and concepts.shape == (2, 16)
    assert logits.dtype == jnp.float32 and concepts.dtype == jnp.float32
    assert bool(jnp.all(jnp.isfinite(logits))) and bool(jnp.all(jnp.isfinite(concepts)))
    print("KERNEL_OK")
</pallas_src>

<mosaic_0001>
module attributes {stable_mosaic.version = 11 : i64} {
  func.func @cbm_head_kernel(%arg0: i32, %arg1: memref<8x64xbf16, #tpu.memory_space<vmem>>, %arg2: memref<64x128xbf16, #tpu.memory_space<vmem>>, %arg3: memref<128x128xbf16, #tpu.memory_space<vmem>>, %arg4: memref<128x128xbf16, #tpu.memory_space<vmem>>, %arg5: memref<128x128xbf16, #tpu.memory_space<vmem>>, %arg6: memref<8x128xf32, #tpu.memory_space<vmem>>, %arg7: memref<8x128xf32, #tpu.memory_space<vmem>>, %arg8: memref<8x128xf32, #tpu.memory_space<vmem>>) attributes {dimension_semantics = [#tpu.dimension_semantics<parallel>], iteration_bounds = array<i64: 1>, scalar_prefetch = 0 : i64, scratch_operands = 0 : i64, tpu.core_type = #tpu.core_type<tc>, window_params = [{transform_indices = @transform_0, window_bounds = array<i64: 8, 64>}, {pipeline_mode = #tpu.pipeline_mode<synchronous>, transform_indices = @transform_1, window_bounds = array<i64: 64, 128>}, {pipeline_mode = #tpu.pipeline_mode<synchronous>, transform_indices = @transform_2, window_bounds = array<i64: 128, 128>}, {pipeline_mode = #tpu.pipeline_mode<synchronous>, transform_indices = @transform_3, window_bounds = array<i64: 128, 128>}, {pipeline_mode = #tpu.pipeline_mode<synchronous>, transform_indices = @transform_4, window_bounds = array<i64: 128, 128>}, {pipeline_mode = #tpu.pipeline_mode<synchronous>, transform_indices = @transform_5, window_bounds = array<i64: 8, 128>}, {transform_indices = @transform_6, window_bounds = array<i64: 8, 128>}, {transform_indices = @transform_7, window_bounds = array<i64: 8, 128>}]} {
    %c0 = arith.constant 0 : index
    %c0_0 = arith.constant 0 : index
    %0 = vector.load %arg6[%c0, %c0_0] : memref<8x128xf32, #tpu.memory_space<vmem>>, vector<8x128xf32>
    %c0_1 = arith.constant 0 : index
    %c0_2 = arith.constant 0 : index
    %1 = vector.load %arg1[%c0_1, %c0_2] : memref<8x64xbf16, #tpu.memory_space<vmem>>, vector<8x64xbf16>
    %c0_3 = arith.constant 0 : index
    %c0_4 = arith.constant 0 : index
    %2 = vector.load %arg2[%c0_3, %c0_4] : memref<64x128xbf16, #tpu.memory_space<vmem>>, vector<64x128xbf16>
    %cst = arith.constant dense<0.000000e+00> : vector<8x128xf32>
    %3 = tpu.matmul %1, %2, %cst {dimension_numbers = #tpu.dot_dimension_numbers<[1], [0], [0], [1], [0, 0, 1, 1], [], []>} : vector<8x64xbf16>, vector<64x128xbf16>, vector<8x128xf32> -> vector<8x128xf32>
    %4 = vector.extract_strided_slice %0 {offsets = [0, 0], sizes = [1, 128], strides = [1, 1]} : vector<8x128xf32> to vector<1x128xf32>
    %5 = vector.broadcast %4 : vector<1x128xf32> to vector<8x128xf32>
    %6 = arith.addf %3, %5 : vector<8x128xf32>
    %cst_5 = arith.constant 0.000000e+00 : f32
    %7 = vector.broadcast %cst_5 : f32 to vector<8x128xf32>
    %8 = arith.maximumf %6, %7 : vector<8x128xf32>
    %9 = arith.truncf %8 : vector<8x128xf32> to vector<8x128xbf16>
    %c0_6 = arith.constant 0 : index
    %c0_7 = arith.constant 0 : index
    %10 = vector.load %arg3[%c0_6, %c0_7] : memref<128x128xbf16, #tpu.memory_space<vmem>>, vector<128x128xbf16>
    %cst_8 = arith.constant dense<0.000000e+00> : vector<8x128xf32>
    %11 = tpu.matmul %9, %10, %cst_8 {dimension_numbers = #tpu.dot_dimension_numbers<[1], [0], [0], [1], [0, 0, 1, 1], [], []>} : vector<8x128xbf16>, vector<128x128xbf16>, vector<8x128xf32> -> vector<8x128xf32>
    %12 = vector.extract_strided_slice %0 {offsets = [1, 0], sizes = [1, 128], strides = [1, 1]} : vector<8x128xf32> to vector<1x128xf32>
    %13 = vector.broadcast %12 : vector<1x128xf32> to vector<8x128xf32>
    %14 = arith.addf %11, %13 : vector<8x128xf32>
    %c0_9 = arith.constant 0 : index
    %c0_10 = arith.constant 0 : index
    %15 = vector.load %arg8[%c0_9, %c0_10] : memref<8x128xf32, #tpu.memory_space<vmem>>, vector<8x128xf32>
    tpu.vector_store %arg8[%c0_9, %c0_10], %14 {strides = array<i32>} : memref<8x128xf32, #tpu.memory_space<vmem>>, vector<8x128xf32>,
    %16 = arith.negf %14 : vector<8x128xf32>
    %17 = math.exp %16 : vector<8x128xf32>
    %cst_11 = arith.constant 1.000000e+00 : f32
    %18 = vector.broadcast %cst_11 : f32 to vector<8x128xf32>
    %19 = arith.addf %18, %17 : vector<8x128xf32>
    %20 = arith.divf %18, %19 : vector<8x128xf32>
    %21 = arith.truncf %20 : vector<8x128xf32> to vector<8x128xbf16>
    %c0_12 = arith.constant 0 : index
    %c0_13 = arith.constant 0 : index
    %22 = vector.load %arg4[%c0_12, %c0_13] : memref<128x128xbf16, #tpu.memory_space<vmem>>, vector<128x128xbf16>
    %cst_14 = arith.constant dense<0.000000e+00> : vector<8x128xf32>
    %23 = tpu.matmul %21, %22, %cst_14 {dimension_numbers = #tpu.dot_dimension_numbers<[1], [0], [0], [1], [0, 0, 1, 1], [], []>} : vector<8x128xbf16>, vector<128x128xbf16>, vector<8x128xf32> -> vector<8x128xf32>
    %24 = vector.extract_strided_slice %0 {offsets = [2, 0], sizes = [1, 128], strides = [1, 1]} : vector<8x128xf32> to vector<1x128xf32>
    %25 = vector.broadcast %24 : vector<1x128xf32> to vector<8x128xf32>
    %26 = arith.addf %23, %25 : vector<8x128xf32>
    %cst_15 = arith.constant 0.000000e+00 : f32
    %27 = vector.broadcast %cst_15 : f32 to vector<8x128xf32>
    %28 = arith.maximumf %26, %27 : vector<8x128xf32>
    %29 = arith.truncf %28 : vector<8x128xf32> to vector<8x128xbf16>
    %c0_16 = arith.constant 0 : index
    %c0_17 = arith.constant 0 : index
    %30 = vector.load %arg5[%c0_16, %c0_17] : memref<128x128xbf16, #tpu.memory_space<vmem>>, vector<128x128xbf16>
    %cst_18 = arith.constant dense<0.000000e+00> : vector<8x128xf32>
    %31 = tpu.matmul %29, %30, %cst_18 {dimension_numbers = #tpu.dot_dimension_numbers<[1], [0], [0], [1], [0, 0, 1, 1], [], []>} : vector<8x128xbf16>, vector<128x128xbf16>, vector<8x128xf32> -> vector<8x128xf32>
    %32 = vector.extract_strided_slice %0 {offsets = [3, 0], sizes = [1, 128], strides = [1, 1]} : vector<8x128xf32> to vector<1x128xf32>
    %33 = vector.broadcast %32 : vector<1x128xf32> to vector<8x128xf32>
    %34 = arith.addf %31, %33 : vector<8x128xf32>
    %c0_19 = arith.constant 0 : index
    %c0_20 = arith.constant 0 : index
    %35 = vector.load %arg7[%c0_19, %c0_20] : memref<8x128xf32, #tpu.memory_space<vmem>>, vector<8x128xf32>
    tpu.vector_store %arg7[%c0_19, %c0_20], %34 {strides = array<i32>} : memref<8x128xf32, #tpu.memory_space<vmem>>, vector<8x128xf32>,
    return
  }
  func.func @transform_0(%arg0: i32) -> (i32, i32) {
    %c0_i32 = arith.constant 0 : i32
    %c0_i32_0 = arith.constant 0 : i32
    return %arg0, %c0_i32 : i32, i32
  }
  func.func @transform_1(%arg0: i32) -> (i32, i32) {
    %c0_i32 = arith.constant 0 : i32
    %c0_i32_0 = arith.constant 0 : i32
    %c0_i32_1 = arith.constant 0 : i32
    return %c0_i32, %c0_i32_0 : i32, i32
  }
  func.func @transform_2(%arg0: i32) -> (i32, i32) {
    %c0_i32 = arith.constant 0 : i32
    %c0_i32_0 = arith.constant 0 : i32
    %c0_i32_1 = arith.constant 0 : i32
    return %c0_i32, %c0_i32_0 : i32, i32
  }
  func.func @transform_3(%arg0: i32) -> (i32, i32) {
    %c0_i32 = arith.constant 0 : i32
    %c0_i32_0 = arith.constant 0 : i32
    %c0_i32_1 = arith.constant 0 : i32
    return %c0_i32, %c0_i32_0 : i32, i32
  }
  func.func @transform_4(%arg0: i32) -> (i32, i32) {
    %c0_i32 = arith.constant 0 : i32
    %c0_i32_0 = arith.constant 0 : i32
    %c0_i32_1 = arith.constant 0 : i32
    return %c0_i32, %c0_i32_0 : i32, i32
  }
  func.func @transform_5(%arg0: i32) -> (i32, i32) {
    %c0_i32 = arith.constant 0 : i32
    %c0_i32_0 = arith.constant 0 : i32
    %c0_i32_1 = arith.constant 0 : i32
    return %c0_i32, %c0_i32_0 : i32, i32
  }
  func.func @transform_6(%arg0: i32) -> (i32, i32) {
    %c0_i32 = arith.constant 0 : i32
    %c0_i32_0 = arith.constant 0 : i32
    return %arg0, %c0_i32 : i32, i32
  }
  func.func @transform_7(%arg0: i32) -> (i32, i32) {
    %c0_i32 = arith.constant 0 : i32
    %c0_i32_0 = arith.constant 0 : i32
    return %arg0, %c0_i32 : i32, i32
  }
}

</mosaic_0001>

<llo_original>
// kernel: reverse
$region0: #{reverse}
  #allocation0 [shape = 's32[1]{0}', space=sflag, size = 0x4, scoped, tag = 'scoped memory for reverse']
  %s0 = inlined_call_operand.vmem [shape: f32[3,3,32,32], index: 0, kind: input, shape index: {}]
  %s1 = inlined_call_operand.vmem [shape: bf16[3,3,32,32], index: 1, kind: output, shape index: {}]
  %s2 = scalar_lea.vmem %s0, 256
  %v3 = vld [vmem:[%s2] sm:$0xff]
  %v4 = vpack.c.bf16 0.0, %v3
  %5 = vst [vmem:[%s1] sm:$0xf] %v4
  %s6 = scalar_lea.vmem %s0, 160
  %v7 = vld [vmem:[%s6] sm:$0xff]
  %s8 = scalar_lea.vmem %s1, 48
  %v9 = vpack.c.bf16 0.0, %v7
  %10 = vst [vmem:[%s8] sm:$0xf] %v9
  %s11 = scalar_lea.vmem %s0, 64
  %v12 = vld [vmem:[%s11] sm:$0xff]
  %s13 = scalar_lea.vmem %s1, 96
  %v14 = vpack.c.bf16 0.0, %v12
  %15 = vst [vmem:[%s13] sm:$0xf] %v14
  %s16 = scalar_lea.vmem %s0, 224
  %v17 = vld [vmem:[%s16] sm:$0xff]
  %s18 = scalar_lea.vmem %s1, 16
  %v19 = vpack.c.bf16 0.0, %v17
  %20 = vst [vmem:[%s18] sm:$0xf] %v19
  %s21 = scalar_lea.vmem %s0, 128
  %v22 = vld [vmem:[%s21] sm:$0xff]
  %s23 = scalar_lea.vmem %s1, 64
  %v24 = vpack.c.bf16 0.0, %v22
  %25 = vst [vmem:[%s23] sm:$0xf] %v24
  %s26 = scalar_lea.vmem %s0, 32
  %v27 = vld [vmem:[%s26] sm:$0xff]
  %s28 = scalar_lea.vmem %s1, 112
  %v29 = vpack.c.bf16 0.0, %v27
  %30 = vst [vmem:[%s28] sm:$0xf] %v29
  %s31 = scalar_lea.vmem %s0, 192
  %v32 = vld [vmem:[%s31] sm:$0xff]
  %s33 = scalar_lea.vmem %s1, 32
  %v34 = vpack.c.bf16 0.0, %v32
  %35 = vst [vmem:[%s33] sm:$0xf] %v34
  %s36 = scalar_lea.vmem %s0, 96
  %v37 = vld [vmem:[%s36] sm:$0xff]
  %s38 = scalar_lea.vmem %s1, 80
  %v39 = vpack.c.bf16 0.0, %v37
  %40 = vst [vmem:[%s38] sm:$0xf] %v39
  %v41 = vld [vmem:[%s0] sm:$0xff]
  %s42 = scalar_lea.vmem %s1, 128
  %v43 = vpack.c.bf16 0.0, %v41
  %44 = vst [vmem:[%s42] sm:$0xf] %v43
  %s45 = scalar_lea.vmem %s0, 264
  %v46 = vld [vmem:[%s45] sm:$0xff]
  %s47 = scalar_lea.vmem %s1, 4
  %v48 = vpack.c.bf16 0.0, %v46
  %49 = vst [vmem:[%s47] sm:$0xf] %v48
  %s50 = scalar_lea.vmem %s0, 168
  %v51 = vld [vmem:[%s50] sm:$0xff]
  %s52 = scalar_lea.vmem %s1, 52
  %v53 = vpack.c.bf16 0.0, %v51
  %54 = vst [vmem:[%s52] sm:$0xf] %v53
  %s55 = scalar_lea.vmem %s0, 72
  %v56 = vld [vmem:[%s55] sm:$0xff]
  %s57 = scalar_lea.vmem %s1, 100
  %v58 = vpack.c.bf16 0.0, %v56
  %59 = vst [vmem:[%s57] sm:$0xf] %v58
  %s60 = scalar_lea.vmem %s0, 232
  %v61 = vld [vmem:[%s60] sm:$0xff]
  %s62 = scalar_lea.vmem %s1, 20
  %v63 = vpack.c.bf16 0.0, %v61
  %64 = vst [vmem:[%s62] sm:$0xf] %v63
  %s65 = scalar_lea.vmem %s0, 136
  %v66 = vld [vmem:[%s65] sm:$0xff]
  %s67 = scalar_lea.vmem %s1, 68
  %v68 = vpack.c.bf16 0.0, %v66
  %69 = vst [vmem:[%s67] sm:$0xf] %v68
  %s70 = scalar_lea.vmem %s0, 40
  %v71 = vld [vmem:[%s70] sm:$0xff]
  %s72 = scalar_lea.vmem %s1, 116
  %v73 = vpack.c.bf16 0.0, %v71
  %74 = vst [vmem:[%s72] sm:$0xf] %v73
  %s75 = scalar_lea.vmem %s0, 200
  %v76 = vld [vmem:[%s75] sm:$0xff]
  %s77 = scalar_lea.vmem %s1, 36
  %v78 = vpack.c.bf16 0.0, %v76
  %79 = vst [vmem:[%s77] sm:$0xf] %v78
  %s80 = scalar_lea.vmem %s0, 104
  %v81 = vld [vmem:[%s80] sm:$0xff]
  %s82 = scalar_lea.vmem %s1, 84
  %v83 = vpack.c.bf16 0.0, %v81
  %84 = vst [vmem:[%s82] sm:$0xf] %v83
  %s85 = scalar_lea.vmem %s0, 8
  %v86 = vld [vmem:[%s85] sm:$0xff]
  %s87 = scalar_lea.vmem %s1, 132
  %v88 = vpack.c.bf16 0.0, %v86
  %89 = vst [vmem:[%s87] sm:$0xf] %v88
  %s90 = scalar_lea.vmem %s0, 272
  %v91 = vld [vmem:[%s90] sm:$0xff]
  %s92 = scalar_lea.vmem %s1, 8
  %v93 = vpack.c.bf16 0.0, %v91
  %94 = vst [vmem:[%s92] sm:$0xf] %v93
  %s95 = scalar_lea.vmem %s0, 176
  %v96 = vld [vmem:[%s95] sm:$0xff]
  %s97 = scalar_lea.vmem %s1, 56
  %v98 = vpack.c.bf16 0.0, %v96
  %99 = vst [vmem:[%s97] sm:$0xf] %v98
  %s100 = scalar_lea.vmem %s0, 80
  %v101 = vld [vmem:[%s100] sm:$0xff]
  %s102 = scalar_lea.vmem %s1, 104
  %v103 = vpack.c.bf16 0.0, %v101
  %104 = vst [vmem:[%s102] sm:$0xf] %v103
  %s105 = scalar_lea.vmem %s0, 240
  %v106 = vld [vmem:[%s105] sm:$0xff]
  %s107 = scalar_lea.vmem %s1, 24
  %v108 = vpack.c.bf16 0.0, %v106
  %109 = vst [vmem:[%s107] sm:$0xf] %v108
  %s110 = scalar_lea.vmem %s0, 144
  %v111 = vld [vmem:[%s110] sm:$0xff]
  %s112 = scalar_lea.vmem %s1, 72
  %v113 = vpack.c.bf16 0.0, %v111
  %114 = vst [vmem:[%s112] sm:$0xf] %v113
  %s115 = scalar_lea.vmem %s0, 48
  %v116 = vld [vmem:[%s115] sm:$0xff]
  %s117 = scalar_lea.vmem %s1, 120
  %v118 = vpack.c.bf16 0.0, %v116
  %119 = vst [vmem:[%s117] sm:$0xf] %v118
  %s120 = scalar_lea.vmem %s0, 208
  %v121 = vld [vmem:[%s120] sm:$0xff]
  %s122 = scalar_lea.vmem %s1, 40
  %v123 = vpack.c.bf16 0.0, %v121
  %124 = vst [vmem:[%s122] sm:$0xf] %v123
  %s125 = scalar_lea.vmem %s0, 112
  %v126 = vld [vmem:[%s125] sm:$0xff]
  %s127 = scalar_lea.vmem %s1, 88
  %v128 = vpack.c.bf16 0.0, %v126
  %129 = vst [vmem:[%s127] sm:$0xf] %v128
  %s130 = scalar_lea.vmem %s0, 16
  %v131 = vld [vmem:[%s130] sm:$0xff]
  %s132 = scalar_lea.vmem %s1, 136
  %v133 = vpack.c.bf16 0.0, %v131
  %134 = vst [vmem:[%s132] sm:$0xf] %v133
  %s135 = scalar_lea.vmem %s0, 280
  %v136 = vld [vmem:[%s135] sm:$0xff]
  %s137 = scalar_lea.vmem %s1, 12
  %v138 = vpack.c.bf16 0.0, %v136
  %139 = vst [vmem:[%s137] sm:$0xf] %v138
  %s140 = scalar_lea.vmem %s0, 184
  %v141 = vld [vmem:[%s140] sm:$0xff]
  %s142 = scalar_lea.vmem %s1, 60
  %v143 = vpack.c.bf16 0.0, %v141
  %144 = vst [vmem:[%s142] sm:$0xf] %v143
  %s145 = scalar_lea.vmem %s0, 88
  %v146 = vld [vmem:[%s145] sm:$0xff]
  %s147 = scalar_lea.vmem %s1, 108
  %v148 = vpack.c.bf16 0.0, %v146
  %149 = vst [vmem:[%s147] sm:$0xf] %v148
  %s150 = scalar_lea.vmem %s0, 248
  %v151 = vld [vmem:[%s150] sm:$0xff]
  %s152 = scalar_lea.vmem %s1, 28
  %v153 = vpack.c.bf16 0.0, %v151
  %154 = vst [vmem:[%s152] sm:$0xf] %v153
  %s155 = scalar_lea.vmem %s0, 152
  %v156 = vld [vmem:[%s155] sm:$0xff]
  %s157 = scalar_lea.vmem %s1, 76
  %v158 = vpack.c.bf16 0.0, %v156
  %159 = vst [vmem:[%s157] sm:$0xf] %v158
  %s160 = scalar_lea.vmem %s0, 56
  %v161 = vld [vmem:[%s160] sm:$0xff]
  %s162 = scalar_lea.vmem %s1, 124
  %v163 = vpack.c.bf16 0.0, %v161
  %164 = vst [vmem:[%s162] sm:$0xf] %v163
  %s165 = scalar_lea.vmem %s0, 216
  %v166 = vld [vmem:[%s165] sm:$0xff]
  %s167 = scalar_lea.vmem %s1, 44
  %v168 = vpack.c.bf16 0.0, %v166
  %169 = vst [vmem:[%s167] sm:$0xf] %v168
  %s170 = scalar_lea.vmem %s0, 120
  %v171 = vld [vmem:[%s170] sm:$0xff]
  %s172 = scalar_lea.vmem %s1, 92
  %v173 = vpack.c.bf16 0.0, %v171
  %174 = vst [vmem:[%s172] sm:$0xf] %v173
  %s175 = scalar_lea.vmem %s0, 24
  %v176 = vld [vmem:[%s175] sm:$0xff]
  %s177 = scalar_lea.vmem %s1, 140
  %v178 = vpack.c.bf16 0.0, %v176
  %179 = vst [vmem:[%s177] sm:$0xf] %v178

// kernel: reverse.4
$region0: #{reverse.4}
  #allocation0 [shape = 's32[1]{0}', space=sflag, size = 0x4, scoped, tag = 'scoped memory for reverse.4']
  %s0 = inlined_call_operand.vmem [shape: f32[3,3,64,64], index: 0, kind: input, shape index: {}]
  %s1 = inlined_call_operand.vmem [shape: bf16[3,3,64,64], index: 1, kind: output, shape index: {}]
  %s2 = scalar_lea.vmem %s0, 512
  %v3 = vld [vmem:[%s2] sm:$0xff]
  %v4 = vpack.c.bf16 0.0, %v3
  %5 = vst [vmem:[%s1] sm:$0xf] %v4
  %s6 = scalar_lea.vmem %s0, 320
  %v7 = vld [vmem:[%s6] sm:$0xff]
  %s8 = scalar_lea.vmem %s1, 96
  %v9 = vpack.c.bf16 0.0, %v7
  %10 = vst [vmem:[%s8] sm:$0xf] %v9
  %s11 = scalar_lea.vmem %s0, 128
  %v12 = vld [vmem:[%s11] sm:$0xff]
  %s13 = scalar_lea.vmem %s1, 192
  %v14 = vpack.c.bf16 0.0, %v12
  %15 = vst [vmem:[%s13] sm:$0xf] %v14
  %s16 = scalar_lea.vmem %s0, 448
  %v17 = vld [vmem:[%s16] sm:$0xff]
  %s18 = scalar_lea.vmem %s1, 32
  %v19 = vpack.c.bf16 0.0, %v17
  %20 = vst [vmem:[%s18] sm:$0xf] %v19
  %s21 = scalar_lea.vmem %s0, 256
  %v22 = vld [vmem:[%s21] sm:$0xff]
  %s23 = scalar_lea.vmem %s1, 128
  %v24 = vpack.c.bf16 0.0, %v22
  %25 = vst [vmem:[%s23] sm:$0xf] %v24
  %s26 = scalar_lea.vmem %s0, 64
  %v27 = vld [vmem:[%s26] sm:$0xff]
  %s28 = scalar_lea.vmem %s1, 224
  %v29 = vpack.c.bf16 0.0, %v27
  %30 = vst [vmem:[%s28] sm:$0xf] %v29
  %s31 = scalar_lea.vmem %s0, 384
  %v32 = vld [vmem:[%s31] sm:$0xff]
  %s33 = scalar_lea.vmem %s1, 64
  %v34 = vpack.c.bf16 0.0, %v32
  %35 = vst [vmem:[%s33] sm:$0xf] %v34
  %s36 = scalar_lea.vmem %s0, 192
  %v37 = vld [vmem:[%s36] sm:$0xff]
  %s38 = scalar_lea.vmem %s1, 160
  %v39 = vpack.c.bf16 0.0, %v37
  %40 = vst [vmem:[%s38] sm:$0xf] %v39
  %v41 = vld [vmem:[%s0] sm:$0xff]
  %s42 = scalar_lea.vmem %s1, 256
  %v43 = vpack.c.bf16 0.0, %v41
  %44 = vst [vmem:[%s42] sm:$0xf] %v43
  %s45 = scalar_lea.vmem %s0, 520
  %v46 = vld [vmem:[%s45] sm:$0xff]
  %s47 = scalar_lea.vmem %s1, 4
  %v48 = vpack.c.bf16 0.0, %v46
  %49 = vst [vmem:[%s47] sm:$0xf] %v48
  %s50 = scalar_lea.vmem %s0, 328
  %v51 = vld [vmem:[%s50] sm:$0xff]
  %s52 = scalar_lea.vmem %s1, 100
  %v53 = vpack.c.bf16 0.0, %v51
  %54 = vst [vmem:[%s52] sm:$0xf] %v53
  %s55 = scalar_lea.vmem %s0, 136
  %v56 = vld [vmem:[%s55] sm:$0xff]
  %s57 = scalar_lea.vmem %s1, 196
  %v58 = vpack.c.bf16 0.0, %v56
  %59 = vst [vmem:[%s57] sm:$0xf] %v58
  %s60 = scalar_lea.vmem %s0, 456
  %v61 = vld [vmem:[%s60] sm:$0xff]
  %s62 = scalar_lea.vmem %s1, 36
  %v63 = vpack.c.bf16 0.0, %v61
  %64 = vst [vmem:[%s62] sm:$0xf] %v63
  %s65 = scalar_lea.vmem %s0, 264
  %v66 = vld [vmem:[%s65] sm:$0xff]
  %s67 = scalar_lea.vmem %s1, 132
  %v68 = vpack.c.bf16 0.0, %v66
  %69 = vst [vmem:[%s67] sm:$0xf] %v68
  %s70 = scalar_lea.vmem %s0, 72
  %v71 = vld [vmem:[%s70] sm:$0xff]
  %s72 = scalar_lea.vmem %s1, 228
  %v73 = vpack.c.bf16 0.0, %v71
  %74 = vst [vmem:[%s72] sm:$0xf] %v73
  %s75 = scalar_lea.vmem %s0, 392
  %v76 = vld [vmem:[%s75] sm:$0xff]
  %s77 = scalar_lea.vmem %s1, 68
  %v78 = vpack.c.bf16 0.0, %v76
  %79 = vst [vmem:[%s77] sm:$0xf] %v78
  %s80 = scalar_lea.vmem %s0, 200
  %v81 = vld [vmem:[%s80] sm:$0xff]
  %s82 = scalar_lea.vmem %s1, 164
  %v83 = vpack.c.bf16 0.0, %v81
  %84 = vst [vmem:[%s82] sm:$0xf] %v83
  %s85 = scalar_lea.vmem %s0, 8
  %v86 = vld [vmem:[%s85] sm:$0xff]
  %s87 = scalar_lea.vmem %s1, 260
  %v88 = vpack.c.bf16 0.0, %v86
  %89 = vst [vmem:[%s87] sm:$0xf] %v88
  %s90 = scalar_lea.vmem %s0, 528
  %v91 = vld [vmem:[%s90] sm:$0xff]
  %s92 = scalar_lea.vmem %s1, 8
  %v93 = vpack.c.bf16 0.0, %v91
  %94 = vst [vmem:[%s92] sm:$0xf] %v93
  %s95 = scalar_lea.vmem %s0, 336
  %v96 = vld [vmem:[%s95] sm:$0xff]
  %s97 = scalar_lea.vmem %s1, 104
  %v98 = vpack.c.bf16 0.0, %v96
  %99 = vst [vmem:[%s97] sm:$0xf] %v98
  %s100 = scalar_lea.vmem %s0, 144
  %v101 = vld [vmem:[%s100] sm:$0xff]
  %s102 = scalar_lea.vmem %s1, 200
  %v103 = vpack.c.bf16 0.0, %v101
  %104 = vst [vmem:[%s102] sm:$0xf] %v103
  %s105 = scalar_lea.vmem %s0, 464
  %v106 = vld [vmem:[%s105] sm:$0xff]
  %s107 = scalar_lea.vmem %s1, 40
  %v108 = vpack.c.bf16 0.0, %v106
  %109 = vst [vmem:[%s107] sm:$0xf] %v108
  %s110 = scalar_lea.vmem %s0, 272
  %v111 = vld [vmem:[%s110] sm:$0xff]
  %s112 = scalar_lea.vmem %s1, 136
  %v113 = vpack.c.bf16 0.0, %v111
  %114 = vst [vmem:[%s112] sm:$0xf] %v113
  %s115 = scalar_lea.vmem %s0, 80
  %v116 = vld [vmem:[%s115] sm:$0xff]
  %s117 = scalar_lea.vmem %s1, 232
  %v118 = vpack.c.bf16 0.0, %v116
  %119 = vst [vmem:[%s117] sm:$0xf] %v118
  %s120 = scalar_lea.vmem %s0, 400
  %v121 = vld [vmem:[%s120] sm:$0xff]
  %s122 = scalar_lea.vmem %s1, 72
  %v123 = vpack.c.bf16 0.0, %v121
  %124 = vst [vmem:[%s122] sm:$0xf] %v123
  %s125 = scalar_lea.vmem %s0, 208
  %v126 = vld [vmem:[%s125] sm:$0xff]
  %s127 = scalar_lea.vmem %s1, 168
  %v128 = vpack.c.bf16 0.0, %v126
  %129 = vst [vmem:[%s127] sm:$0xf] %v128
  %s130 = scalar_lea.vmem %s0, 16
  %v131 = vld [vmem:[%s130] sm:$0xff]
  %s132 = scalar_lea.vmem %s1, 264
  %v133 = vpack.c.bf16 0.0, %v131
  %134 = vst [vmem:[%s132] sm:$0xf] %v133
  %s135 = scalar_lea.vmem %s0, 536
  %v136 = vld [vmem:[%s135] sm:$0xff]
  %s137 = scalar_lea.vmem %s1, 12
  %v138 = vpack.c.bf16 0.0, %v136
  %139 = vst [vmem:[%s137] sm:$0xf] %v138
  %s140 = scalar_lea.vmem %s0, 344
  %v141 = vld [vmem:[%s140] sm:$0xff]
  %s142 = scalar_lea.vmem %s1, 108
  %v143 = vpack.c.bf16 0.0, %v141
  %144 = vst [vmem:[%s142] sm:$0xf] %v143
  %s145 = scalar_lea.vmem %s0, 152
  %v146 = vld [vmem:[%s145] sm:$0xff]
  %s147 = scalar_lea.vmem %s1, 204
  %v148 = vpack.c.bf16 0.0, %v146
  %149 = vst [vmem:[%s147] sm:$0xf] %v148
  %s150 = scalar_lea.vmem %s0, 472
  %v151 = vld [vmem:[%s150] sm:$0xff]
  %s152 = scalar_lea.vmem %s1, 44
  %v153 = vpack.c.bf16 0.0, %v151
  %154 = vst [vmem:[%s152] sm:$0xf] %v153
  %s155 = scalar_lea.vmem %s0, 280
  %v156 = vld [vmem:[%s155] sm:$0xff]
  %s157 = scalar_lea.vmem %s1, 140
  %v158 = vpack.c.bf16 0.0, %v156
  %159 = vst [vmem:[%s157] sm:$0xf] %v158
  %s160 = scalar_lea.vmem %s0, 88
  %v161 = vld [vmem:[%s160] sm:$0xff]
  %s162 = scalar_lea.vmem %s1, 236
  %v163 = vpack.c.bf16 0.0, %v161
  %164 = vst [vmem:[%s162] sm:$0xf] %v163
  %s165 = scalar_lea.vmem %s0, 408
  %v166 = vld [vmem:[%s165] sm:$0xff]
  %s167 = scalar_lea.vmem %s1, 76
  %v168 = vpack.c.bf16 0.0, %v166
  %169 = vst [vmem:[%s167] sm:$0xf] %v168
  %s170 = scalar_lea.vmem %s0, 216
  %v171 = vld [vmem:[%s170] sm:$0xff]
  %s172 = scalar_lea.vmem %s1, 172
  %v173 = vpack.c.bf16 0.0, %v171
  %174 = vst [vmem:[%s172] sm:$0xf] %v173
  %s175 = scalar_lea.vmem %s0, 24
  %v176 = vld [vmem:[%s175] sm:$0xff]
  %s177 = scalar_lea.vmem %s1, 268
  %v178 = vpack.c.bf16 0.0, %v176
  %179 = vst [vmem:[%s177] sm:$0xf] %v178
  %s180 = scalar_lea.vmem %s0, 544
  %v181 = vld [vmem:[%s180] sm:$0xff]
  %s182 = scalar_lea.vmem %s1, 16
  %v183 = vpack.c.bf16 0.0, %v181
  %184 = vst [vmem:[%s182] sm:$0xf] %v183
  %s185 = scalar_lea.vmem %s0, 352
  %v186 = vld [vmem:[%s185] sm:$0xff]
  %s187 = scalar_lea.vmem %s1, 112
  %v188 = vpack.c.bf16 0.0, %v186
  %189 = vst [vmem:[%s187] sm:$0xf] %v188
  %s190 = scalar_lea.vmem %s0, 160
  %v191 = vld [vmem:[%s190] sm:$0xff]
  %s192 = scalar_lea.vmem %s1, 208
  %v193 = vpack.c.bf16 0.0, %v191
  %194 = vst [vmem:[%s192] sm:$0xf] %v193
  %s195 = scalar_lea.vmem %s0, 480
  %v196 = vld [vmem:[%s195] sm:$0xff]
  %s197 = scalar_lea.vmem %s1, 48
  %v198 = vpack.c.bf16 0.0, %v196
  %199 = vst [vmem:[%s197] sm:$0xf] %v198
  %s200 = scalar_lea.vmem %s0, 288
  %v201 = vld [vmem:[%s200] sm:$0xff]
  %s202 = scalar_lea.vmem %s1, 144
  %v203 = vpack.c.bf16 0.0, %v201
  %204 = vst [vmem:[%s202] sm:$0xf] %v203
  %s205 = scalar_lea.vmem %s0, 96
  %v206 = vld [vmem:[%s205] sm:$0xff]
  %s207 = scalar_lea.vmem %s1, 240
  %v208 = vpack.c.bf16 0.0, %v206
  %209 = vst [vmem:[%s207] sm:$0xf] %v208
  %s210 = scalar_lea.vmem %s0, 416
  %v211 = vld [vmem:[%s210] sm:$0xff]
  %s212 = scalar_lea.vmem %s1, 80
  %v213 = vpack.c.bf16 0.0, %v211
  %214 = vst [vmem:[%s212] sm:$0xf] %v213
  %s215 = scalar_lea.vmem %s0, 224
  %v216 = vld [vmem:[%s215] sm:$0xff]
  %s217 = scalar_lea.vmem %s1, 176
  %v218 = vpack.c.bf16 0.0, %v216
  %219 = vst [vmem:[%s217] sm:$0xf] %v218
  %s220 = scalar_lea.vmem %s0, 32
  %v221 = vld [vmem:[%s220] sm:$0xff]
  %s222 = scalar_lea.vmem %s1, 272
  %v223 = vpack.c.bf16 0.0, %v221
  %224 = vst [vmem:[%s222] sm:$0xf] %v223
  %s225 = scalar_lea.vmem %s0, 552
  %v226 = vld [vmem:[%s225] sm:$0xff]
  %s227 = scalar_lea.vmem %s1, 20
  %v228 = vpack.c.bf16 0.0, %v226
  %229 = vst [vmem:[%s227] sm:$0xf] %v228
  %s230 = scalar_lea.vmem %s0, 360
  %v231 = vld [vmem:[%s230] sm:$0xff]
  %s232 = scalar_lea.vmem %s1, 116
  %v233 = vpack.c.bf16 0.0, %v231
  %234 = vst [vmem:[%s232] sm:$0xf] %v233
  %s235 = scalar_lea.vmem %s0, 168
  %v236 = vld [vmem:[%s235] sm:$0xff]
  %s237 = scalar_lea.vmem %s1, 212
  %v238 = vpack.c.bf16 0.0, %v236
  %239 = vst [vmem:[%s237] sm:$0xf] %v238
  %s240 = scalar_lea.vmem %s0, 488
  %v241 = vld [vmem:[%s240] sm:$0xff]
  %s242 = scalar_lea.vmem %s1, 52
  %v243 = vpack.c.bf16 0.0, %v241
  %244 = vst [vmem:[%s242] sm:$0xf] %v243
  %s245 = scalar_lea.vmem %s0, 296
  %v246 = vld [vmem:[%s245] sm:$0xff]
  %s247 = scalar_lea.vmem %s1, 148
  %v248 = vpack.c.bf16 0.0, %v246
  %249 = vst [vmem:[%s247] sm:$0xf] %v248
  %s250 = scalar_lea.vmem %s0, 104
  %v251 = vld [vmem:[%s250] sm:$0xff]
  %s252 = scalar_lea.vmem %s1, 244
  %v253 = vpack.c.bf16 0.0, %v251
  %254 = vst [vmem:[%s252] sm:$0xf] %v253
  %s255 = scalar_lea.vmem %s0, 424
  %v256 = vld [vmem:[%s255] sm:$0xff]
  %s257 = scalar_lea.vmem %s1, 84
  %v258 = vpack.c.bf16 0.0, %v256
  %259 = vst [vmem:[%s257] sm:$0xf] %v258
  %s260 = scalar_lea.vmem %s0, 232
  %v261 = vld [vmem:[%s260] sm:$0xff]
  %s262 = scalar_lea.vmem %s1, 180
  %v263 = vpack.c.bf16 0.0, %v261
  %264 = vst [vmem:[%s262] sm:$0xf] %v263
  %s265 = scalar_lea.vmem %s0, 40
  %v266 = vld [vmem:[%s265] sm:$0xff]
  %s267 = scalar_lea.vmem %s1, 276
  %v268 = vpack.c.bf16 0.0, %v266
  %269 = vst [vmem:[%s267] sm:$0xf] %v268
  %s270 = scalar_lea.vmem %s0, 560
  %v271 = vld [vmem:[%s270] sm:$0xff]
  %s272 = scalar_lea.vmem %s1, 24
  %v273 = vpack.c.bf16 0.0, %v271
  %274 = vst [vmem:[%s272] sm:$0xf] %v273
  %s275 = scalar_lea.vmem %s0, 368
  %v276 = vld [vmem:[%s275] sm:$0xff]
  %s277 = scalar_lea.vmem %s1, 120
  %v278 = vpack.c.bf16 0.0, %v276
  %279 = vst [vmem:[%s277] sm:$0xf] %v278
  %s280 = scalar_lea.vmem %s0, 176
  %v281 = vld [vmem:[%s280] sm:$0xff]
  %s282 = scalar_lea.vmem %s1, 216
  %v283 = vpack.c.bf16 0.0, %v281
  %284 = vst [vmem:[%s282] sm:$0xf] %v283
  %s285 = scalar_lea.vmem %s0, 496
  %v286 = vld [vmem:[%s285] sm:$0xff]
  %s287 = scalar_lea.vmem %s1, 56
  %v288 = vpack.c.bf16 0.0, %v286
  %289 = vst [vmem:[%s287] sm:$0xf] %v288
  %s290 = scalar_lea.vmem %s0, 304
  %v291 = vld [vmem:[%s290] sm:$0xff]
  %s292 = scalar_lea.vmem %s1, 152
  %v293 = vpack.c.bf16 0.0, %v291
  %294 = vst [vmem:[%s292] sm:$0xf] %v293
  %s295 = scalar_lea.vmem %s0, 112
  %v296 = vld [vmem:[%s295] sm:$0xff]
  %s297 = scalar_lea.vmem %s1, 248
  %v298 = vpack.c.bf16 0.0, %v296
  %299 = vst [vmem:[%s297] sm:$0xf] %v298
  %s300 = scalar_lea.vmem %s0, 432
  %v301 = vld [vmem:[%s300] sm:$0xff]
  %s302 = scalar_lea.vmem %s1, 88
  %v303 = vpack.c.bf16 0.0, %v301
  %304 = vst [vmem:[%s302] sm:$0xf] %v303
  %s305 = scalar_lea.vmem %s0, 240
  %v306 = vld [vmem:[%s305] sm:$0xff]
  %s307 = scalar_lea.vmem %s1, 184
  %v308 = vpack.c.bf16 0.0, %v306
  %309 = vst [vmem:[%s307] sm:$0xf] %v308
  %s310 = scalar_lea.vmem %s0, 48
  %v311 = vld [vmem:[%s310] sm:$0xff]
  %s312 = scalar_lea.vmem %s1, 280
  %v313 = vpack.c.bf16 0.0, %v311
  %314 = vst [vmem:[%s312] sm:$0xf] %v313
  %s315 = scalar_lea.vmem %s0, 568
  %v316 = vld [vmem:[%s315] sm:$0xff]
  %s317 = scalar_lea.vmem %s1, 28
  %v318 = vpack.c.bf16 0.0, %v316
  %319 = vst [vmem:[%s317] sm:$0xf] %v318
  %s320 = scalar_lea.vmem %s0, 376
  %v321 = vld [vmem:[%s320] sm:$0xff]
  %s322 = scalar_lea.vmem %s1, 124
  %v323 = vpack.c.bf16 0.0, %v321
  %324 = vst [vmem:[%s322] sm:$0xf] %v323
  %s325 = scalar_lea.vmem %s0, 184
  %v326 = vld [vmem:[%s325] sm:$0xff]
  %s327 = scalar_lea.vmem %s1, 220
  %v328 = vpack.c.bf16 0.0, %v326
  %329 = vst [vmem:[%s327] sm:$0xf] %v328
  %s330 = scalar_lea.vmem %s0, 504
  %v331 = vld [vmem:[%s330] sm:$0xff]
  %s332 = scalar_lea.vmem %s1, 60
  %v333 = vpack.c.bf16 0.0, %v331
  %334 = vst [vmem:[%s332] sm:$0xf] %v333
  %s335 = scalar_lea.vmem %s0, 312
  %v336 = vld [vmem:[%s335] sm:$0xff]
  %s337 = scalar_lea.vmem %s1, 156
  %v338 = vpack.c.bf16 0.0, %v336
  %339 = vst [vmem:[%s337] sm:$0xf] %v338
  %s340 = scalar_lea.vmem %s0, 120
  %v341 = vld [vmem:[%s340] sm:$0xff]
  %s342 = scalar_lea.vmem %s1, 252
  %v343 = vpack.c.bf16 0.0, %v341
  %344 = vst [vmem:[%s342] sm:$0xf] %v343
  %s345 = scalar_lea.vmem %s0, 440
  %v346 = vld [vmem:[%s345] sm:$0xff]
  %s347 = scalar_lea.vmem %s1, 92
  %v348 = vpack.c.bf16 0.0, %v346
  %349 = vst [vmem:[%s347] sm:$0xf] %v348
  %s350 = scalar_lea.vmem %s0, 248
  %v351 = vld [vmem:[%s350] sm:$0xff]
  %s352 = scalar_lea.vmem %s1, 188
  %v353 = vpack.c.bf16 0.0, %v351
  %354 = vst [vmem:[%s352] sm:$0xf] %v353
  %s355 = scalar_lea.vmem %s0, 56
  %v356 = vld [vmem:[%s355] sm:$0xff]
  %s357 = scalar_lea.vmem %s1, 284
  %v358 = vpack.c.bf16 0.0, %v356
  %359 = vst [vmem:[%s357] sm:$0xf] %v358

// kernel: reverse.3
$region0: #{reverse.3}
  #allocation0 [shape = 's32[1]{0}', space=sflag, size = 0x4, scoped, tag = 'scoped memory for reverse.3']
  %s0 = inlined_call_operand.vmem [shape: f32[3,3,32,64], index: 0, kind: input, shape index: {}]
  %s1 = inlined_call_operand.vmem [shape: bf16[3,3,32,64], index: 1, kind: output, shape index: {}]
  %s2 = scalar_lea.vmem %s0, 256
  %v3 = vld [vmem:[%s2] sm:$0xff]
  %v4 = vpack.c.bf16 0.0, %v3
  %5 = vst [vmem:[%s1] sm:$0xf] %v4
  %s6 = scalar_lea.vmem %s0, 160
  %v7 = vld [vmem:[%s6] sm:$0xff]
  %s8 = scalar_lea.vmem %s1, 48
  %v9 = vpack.c.bf16 0.0, %v7
  %10 = vst [vmem:[%s8] sm:$0xf] %v9
  %s11 = scalar_lea.vmem %s0, 64
  %v12 = vld [vmem:[%s11] sm:$0xff]
  %s13 = scalar_lea.vmem %s1, 96
  %v14 = vpack.c.bf16 0.0, %v12
  %15 = vst [vmem:[%s13] sm:$0xf] %v14
  %s16 = scalar_lea.vmem %s0, 224
  %v17 = vld [vmem:[%s16] sm:$0xff]
  %s18 = scalar_lea.vmem %s1, 16
  %v19 = vpack.c.bf16 0.0, %v17
  %20 = vst [vmem:[%s18] sm:$0xf] %v19
  %s21 = scalar_lea.vmem %s0, 128
  %v22 = vld [vmem:[%s21] sm:$0xff]
  %s23 = scalar_lea.vmem %s1, 64
  %v24 = vpack.c.bf16 0.0, %v22
  %25 = vst [vmem:[%s23] sm:$0xf] %v24
  %s26 = scalar_lea.vmem %s0, 32
  %v27 = vld [vmem:[%s26] sm:$0xff]
  %s28 = scalar_lea.vmem %s1, 112
  %v29 = vpack.c.bf16 0.0, %v27
  %30 = vst [vmem:[%s28] sm:$0xf] %v29
  %s31 = scalar_lea.vmem %s0, 192
  %v32 = vld [vmem:[%s31] sm:$0xff]
  %s33 = scalar_lea.vmem %s1, 32
  %v34 = vpack.c.bf16 0.0, %v32
  %35 = vst [vmem:[%s33] sm:$0xf] %v34
  %s36 = scalar_lea.vmem %s0, 96
  %v37 = vld [vmem:[%s36] sm:$0xff]
  %s38 = scalar_lea.vmem %s1, 80
  %v39 = vpack.c.bf16 0.0, %v37
  %40 = vst [vmem:[%s38] sm:$0xf] %v39
  %v41 = vld [vmem:[%s0] sm:$0xff]
  %s42 = scalar_lea.vmem %s1, 128
  %v43 = vpack.c.bf16 0.0, %v41
  %44 = vst [vmem:[%s42] sm:$0xf] %v43
  %s45 = scalar_lea.vmem %s0, 264
  %v46 = vld [vmem:[%s45] sm:$0xff]
  %s47 = scalar_lea.vmem %s1, 4
  %v48 = vpack.c.bf16 0.0, %v46
  %49 = vst [vmem:[%s47] sm:$0xf] %v48
  %s50 = scalar_lea.vmem %s0, 168
  %v51 = vld [vmem:[%s50] sm:$0xff]
  %s52 = scalar_lea.vmem %s1, 52
  %v53 = vpack.c.bf16 0.0, %v51
  %54 = vst [vmem:[%s52] sm:$0xf] %v53
  %s55 = scalar_lea.vmem %s0, 72
  %v56 = vld [vmem:[%s55] sm:$0xff]
  %s57 = scalar_lea.vmem %s1, 100
  %v58 = vpack.c.bf16 0.0, %v56
  %59 = vst [vmem:[%s57] sm:$0xf] %v58
  %s60 = scalar_lea.vmem %s0, 232
  %v61 = vld [vmem:[%s60] sm:$0xff]
  %s62 = scalar_lea.vmem %s1, 20
  %v63 = vpack.c.bf16 0.0, %v61
  %64 = vst [vmem:[%s62] sm:$0xf] %v63
  %s65 = scalar_lea.vmem %s0, 136
  %v66 = vld [vmem:[%s65] sm:$0xff]
  %s67 = scalar_lea.vmem %s1, 68
  %v68 = vpack.c.bf16 0.0, %v66
  %69 = vst [vmem:[%s67] sm:$0xf] %v68
  %s70 = scalar_lea.vmem %s0, 40
  %v71 = vld [vmem:[%s70] sm:$0xff]
  %s72 = scalar_lea.vmem %s1, 116
  %v73 = vpack.c.bf16 0.0, %v71
  %74 = vst [vmem:[%s72] sm:$0xf] %v73
  %s75 = scalar_lea.vmem %s0, 200
  %v76 = vld [vmem:[%s75] sm:$0xff]
  %s77 = scalar_lea.vmem %s1, 36
  %v78 = vpack.c.bf16 0.0, %v76
  %79 = vst [vmem:[%s77] sm:$0xf] %v78
  %s80 = scalar_lea.vmem %s0, 104
  %v81 = vld [vmem:[%s80] sm:$0xff]
  %s82 = scalar_lea.vmem %s1, 84
  %v83 = vpack.c.bf16 0.0, %v81
  %84 = vst [vmem:[%s82] sm:$0xf] %v83
  %s85 = scalar_lea.vmem %s0, 8
  %v86 = vld [vmem:[%s85] sm:$0xff]
  %s87 = scalar_lea.vmem %s1, 132
  %v88 = vpack.c.bf16 0.0, %v86
  %89 = vst [vmem:[%s87] sm:$0xf] %v88
  %s90 = scalar_lea.vmem %s0, 272
  %v91 = vld [vmem:[%s90] sm:$0xff]
  %s92 = scalar_lea.vmem %s1, 8
  %v93 = vpack.c.bf16 0.0, %v91
  %94 = vst [vmem:[%s92] sm:$0xf] %v93
  %s95 = scalar_lea.vmem %s0, 176
  %v96 = vld [vmem:[%s95] sm:$0xff]
  %s97 = scalar_lea.vmem %s1, 56
  %v98 = vpack.c.bf16 0.0, %v96
  %99 = vst [vmem:[%s97] sm:$0xf] %v98
  %s100 = scalar_lea.vmem %s0, 80
  %v101 = vld [vmem:[%s100] sm:$0xff]
  %s102 = scalar_lea.vmem %s1, 104
  %v103 = vpack.c.bf16 0.0, %v101
  %104 = vst [vmem:[%s102] sm:$0xf] %v103
  %s105 = scalar_lea.vmem %s0, 240
  %v106 = vld [vmem:[%s105] sm:$0xff]
  %s107 = scalar_lea.vmem %s1, 24
  %v108 = vpack.c.bf16 0.0, %v106
  %109 = vst [vmem:[%s107] sm:$0xf] %v108
  %s110 = scalar_lea.vmem %s0, 144
  %v111 = vld [vmem:[%s110] sm:$0xff]
  %s112 = scalar_lea.vmem %s1, 72
  %v113 = vpack.c.bf16 0.0, %v111
  %114 = vst [vmem:[%s112] sm:$0xf] %v113
  %s115 = scalar_lea.vmem %s0, 48
  %v116 = vld [vmem:[%s115] sm:$0xff]
  %s117 = scalar_lea.vmem %s1, 120
  %v118 = vpack.c.bf16 0.0, %v116
  %119 = vst [vmem:[%s117] sm:$0xf] %v118
  %s120 = scalar_lea.vmem %s0, 208
  %v121 = vld [vmem:[%s120] sm:$0xff]
  %s122 = scalar_lea.vmem %s1, 40
  %v123 = vpack.c.bf16 0.0, %v121
  %124 = vst [vmem:[%s122] sm:$0xf] %v123
  %s125 = scalar_lea.vmem %s0, 112
  %v126 = vld [vmem:[%s125] sm:$0xff]
  %s127 = scalar_lea.vmem %s1, 88
  %v128 = vpack.c.bf16 0.0, %v126
  %129 = vst [vmem:[%s127] sm:$0xf] %v128
  %s130 = scalar_lea.vmem %s0, 16
  %v131 = vld [vmem:[%s130] sm:$0xff]
  %s132 = scalar_lea.vmem %s1, 136
  %v133 = vpack.c.bf16 0.0, %v131
  %134 = vst [vmem:[%s132] sm:$0xf] %v133
  %s135 = scalar_lea.vmem %s0, 280
  %v136 = vld [vmem:[%s135] sm:$0xff]
  %s137 = scalar_lea.vmem %s1, 12
  %v138 = vpack.c.bf16 0.0, %v136
  %139 = vst [vmem:[%s137] sm:$0xf] %v138
  %s140 = scalar_lea.vmem %s0, 184
  %v141 = vld [vmem:[%s140] sm:$0xff]
  %s142 = scalar_lea.vmem %s1, 60
  %v143 = vpack.c.bf16 0.0, %v141
  %144 = vst [vmem:[%s142] sm:$0xf] %v143
  %s145 = scalar_lea.vmem %s0, 88
  %v146 = vld [vmem:[%s145] sm:$0xff]
  %s147 = scalar_lea.vmem %s1, 108
  %v148 = vpack.c.bf16 0.0, %v146
  %149 = vst [vmem:[%s147] sm:$0xf] %v148
  %s150 = scalar_lea.vmem %s0, 248
  %v151 = vld [vmem:[%s150] sm:$0xff]
  %s152 = scalar_lea.vmem %s1, 28
  %v153 = vpack.c.bf16 0.0, %v151
  %154 = vst [vmem:[%s152] sm:$0xf] %v153
  %s155 = scalar_lea.vmem %s0, 152
  %v156 = vld [vmem:[%s155] sm:$0xff]
  %s157 = scalar_lea.vmem %s1, 76
  %v158 = vpack.c.bf16 0.0, %v156
  %159 = vst [vmem:[%s157] sm:$0xf] %v158
  %s160 = scalar_lea.vmem %s0, 56
  %v161 = vld [vmem:[%s160] sm:$0xff]
  %s162 = scalar_lea.vmem %s1, 124
  %v163 = vpack.c.bf16 0.0, %v161
  %164 = vst [vmem:[%s162] sm:$0xf] %v163
  %s165 = scalar_lea.vmem %s0, 216
  %v166 = vld [vmem:[%s165] sm:$0xff]
  %s167 = scalar_lea.vmem %s1, 44
  %v168 = vpack.c.bf16 0.0, %v166
  %169 = vst [vmem:[%s167] sm:$0xf] %v168
  %s170 = scalar_lea.vmem %s0, 120
  %v171 = vld [vmem:[%s170] sm:$0xff]
  %s172 = scalar_lea.vmem %s1, 92
  %v173 = vpack.c.bf16 0.0, %v171
  %174 = vst [vmem:[%s172] sm:$0xf] %v173
  %s175 = scalar_lea.vmem %s0, 24
  %v176 = vld [vmem:[%s175] sm:$0xff]
  %s177 = scalar_lea.vmem %s1, 140
  %v178 = vpack.c.bf16 0.0, %v176
  %179 = vst [vmem:[%s177] sm:$0xf] %v178

// kernel: cub_cbm_forward.1
$region0: #{cub_cbm_forward.1}
  #allocation0 [shape = 'u32[]', space=smem, size = 0x4, offset = 0x4, fixed_abs, tag = 'smem constant byte address 0x4 - core index']
  #allocation1 [shape = 'u32[144,128]{1,0:T(1,128)}', space=vmem, size = 0x12000, scoped, tag = 'internal scratch']
  %s0 = inlined_call_operand.vmem [shape: bf16[8,64], index: 0, kind: input, shape index: {}]
  %s1 = inlined_call_operand.vmem [shape: bf16[64,128], index: 1, kind: input, shape index: {}]
  %s2 = inlined_call_operand.vmem [shape: bf16[128,128], index: 2, kind: input, shape index: {}]
  %s3 = inlined_call_operand.vmem [shape: bf16[128,128], index: 3, kind: input, shape index: {}]
  %s4 = inlined_call_operand.vmem [shape: bf16[128,128], index: 4, kind: input, shape index: {}]
  %s5 = inlined_call_operand.vmem [shape: f32[8,128], index: 5, kind: input, shape index: {}]
  %s6 = inlined_call_operand.vmem [shape: f32[8,128], index: 6, kind: output, shape index: {0}]
  %s7 = inlined_call_operand.vmem [shape: f32[8,128], index: 7, kind: output, shape index: {1}]
  %8 = xla_tuple %s6, %s7
  %s9 = sld [smem:[#allocation0]]
  $region42: #{cub_cbm_forward.1} parent=0
    _
  %s11 = ssub.s32 1, %s9
  %s12 = scalar_select 0, %s11, %s9
  // Predicated region
  $region2: #{cub_cbm_forward.1} parent=0 // pred_check
    _
  $region3: #{cub_cbm_forward.1} parent=0 // pred_check_branch
    %14 = sbr.rel (0) target = $region5
  $region4: #{cub_cbm_forward.1} parent=0 // pred_region
    _
  $region5: #{cub_cbm_forward.1} parent=0 // pred_fallthru
    _
  // Predicated region
  $region6: #{cub_cbm_forward.1} parent=0 // pred_check
    _
  $region7: #{cub_cbm_forward.1} parent=0 // pred_check_branch
    %16 = sbr.rel (0) target = $region9
  $region8: #{cub_cbm_forward.1} parent=0 // pred_region
    _
  $region9: #{cub_cbm_forward.1} parent=0 // pred_fallthru
    _
  // Predicated region
  $region10: #{cub_cbm_forward.1} parent=0 // pred_check
    _
  $region11: #{cub_cbm_forward.1} parent=0 // pred_check_branch
    %18 = sbr.rel (0) target = $region13
  $region12: #{cub_cbm_forward.1} parent=0 // pred_region
    _
  $region13: #{cub_cbm_forward.1} parent=0 // pred_fallthru
    _
  // Predicated region
  $region14: #{cub_cbm_forward.1} parent=0 // pred_check
    _
  $region15: #{cub_cbm_forward.1} parent=0 // pred_check_branch
    %20 = sbr.rel (0) target = $region17
  $region16: #{cub_cbm_forward.1} parent=0 // pred_region
    _
  $region17: #{cub_cbm_forward.1} parent=0 // pred_fallthru
    _
  // Predicated region
  $region18: #{cub_cbm_forward.1} parent=0 // pred_check
    _
  $region19: #{cub_cbm_forward.1} parent=0 // pred_check_branch
    %22 = sbr.rel (0) target = $region21
  $region20: #{cub_cbm_forward.1} parent=0 // pred_region
    _
  $region21: #{cub_cbm_forward.1} parent=0 // pred_fallthru
    _
  // Predicated region
  $region22: #{cub_cbm_forward.1} parent=0 // pred_check
    _
  $region23: #{cub_cbm_forward.1} parent=0 // pred_check_branch
    %24 = sbr.rel (0) target = $region25
  $region24: #{cub_cbm_forward.1} parent=0 // pred_region
    _
  $region25: #{cub_cbm_forward.1} parent=0 // pred_fallthru
    _
  %v26 = vld [vmem:[%s5] sm:$0xff]
  %v27 = vld [vmem:[%s0] sm:$0xf]
  %v28 = vld [vmem:[%s1] sm:$0xf]
  %v29 = vld [vmem:[%s1 + $0x4] sm:$0xf]
  %v30 = vld [vmem:[%s1 + $0x8] sm:$0xf]
  %v31 = vld [vmem:[%s1 + $0xc] sm:$0xf]
  %v32 = vld [vmem:[%s1 + $0x10] sm:$0xf]
  %v33 = vld [vmem:[%s1 + $0x14] sm:$0xf]
  %v34 = vld [vmem:[%s1 + $0x18] sm:$0xf]
  %v35 = vld [vmem:[%s1 + $0x1c] sm:$0xf]
  %v36 = vlaneseq
  %v37 = vshrl.u32 %v36, 7
  %v38 = vsub.s32 0, %v37
  %v39 = vrot.slane %v26, %v38
  %v48 = vunpack.c.l.b16 %v28
  %v49 = vunpack.c.l.b16 %v29
  %v50 = vunpack.c.l.b16 %v30
  %v51 = vunpack.c.l.b16 %v31
  %v52 = vunpack.c.l.b16 %v32
  %v53 = vunpack.c.l.b16 %v33
  %v54 = vunpack.c.l.b16 %v34
  %v55 = vunpack.c.l.b16 %v35
  %v56 = vpack.c.b16 %v49, %v48
  %v57 = vpack.c.b16 %v51, %v50
  %v58 = vpack.c.b16 %v53, %v52
  %v59 = vpack.c.b16 %v55, %v54
  %vm64 = vcmask 523264
  %v66 = vsel %vm64, %v27, 0
  %68 = vmatprep.subr.bf16.mxu0 0
  %69 = vmatpush1.bf16.msra.mxu0 0
  %70 = vmatprep.subr.bf16.mxu0 0
  %71 = vmatpush1.bf16.msra.mxu0 0
  %72 = vmatprep.subr.bf16.mxu0 0
  %73 = vmatpush1.bf16.msra.mxu0 0
  %74 = vmatprep.subr.bf16.mxu0 0
  %75 = vmatpush1.bf16.msra.mxu0 0
  %76 = vmatprep.subr.bf16.mxu0 0
  %77 = vmatpush1.bf16.msra.mxu0 %v59
  %78 = vmatprep.subr.bf16.mxu0 0
  %79 = vmatpush1.bf16.msra.mxu0 %v58
  %80 = vmatprep.subr.bf16.mxu0 0
  %81 = vmatpush1.bf16.msra.mxu0 %v57
  %82 = vmatprep.subr.bf16.mxu0 0
  %83 = vmatpush1.bf16.msra.mxu0 %v56
  %84 = vmatprep.subr.bf16.mxu0 0
  %85 = vmatpush2.bf16.msra.mxu0 0
  %86 = vmatprep.subr.bf16.mxu0 0
  %87 = vmatpush2.bf16.msra.mxu0 0
  %88 = vmatprep.subr.bf16.mxu0 0
  %89 = vmatpush2.bf16.msra.mxu0 0
  %90 = vmatprep.subr.bf16.mxu0 0
  %91 = vmatpush2.bf16.msra.mxu0 0
  %92 = vmatprep.subr.bf16.mxu0 0
  %93 = vmatpush2.bf16.msra.mxu0 0
  %94 = vmatprep.subr.bf16.mxu0 0
  %95 = vmatpush2.bf16.msra.mxu0 0
  %96 = vmatprep.subr.bf16.mxu0 0
  %97 = vmatpush2.bf16.msra.mxu0 0
  %98 = vmatprep.subr.bf16.mxu0 0
  %99 = vmatpush2.bf16.msra.mxu0 0
  %100 = vmatprep.mubr.bf16.mxu0 0
  %101 = vmatmul.mubr.bf16.gmra.mxu0 %v66
  %v102 = vpop.f32.mrf.mxu0
  %v103 = vadd.f32 %v39, %v102
  %v104 = vpop.f32.mrf.mxu0
  %v105 = vpop.f32.mrf.mxu0
  %v106 = vpop.f32.mrf.mxu0
  %107 = vdwg.mxu0
  %v108 = vmax.f32 %v103, 0.0
  %v109 = vpack.c.bf16 %v108, %v108
  %v110 = vld [vmem:[%s2] sm:$0xf]
  %v111 = vld [vmem:[%s2 + $0x4] sm:$0xf]
  %v112 = vld [vmem:[%s2 + $0x8] sm:$0xf]
  %v113 = vld [vmem:[%s2 + $0xc] sm:$0xf]
  %v114 = vld [vmem:[%s2 + $0x10] sm:$0xf]
  %v115 = vld [vmem:[%s2 + $0x14] sm:$0xf]
  %v116 = vld [vmem:[%s2 + $0x18] sm:$0xf]
  %v117 = vld [vmem:[%s2 + $0x1c] sm:$0xf]
  %v118 = vld [vmem:[%s2 + $0x20] sm:$0xf]
  %v119 = vld [vmem:[%s2 + $0x24] sm:$0xf]
  %v120 = vld [vmem:[%s2 + $0x28] sm:$0xf]
  %v121 = vld [vmem:[%s2 + $0x2c] sm:$0xf]
  %v122 = vld [vmem:[%s2 + $0x30] sm:$0xf]
  %v123 = vld [vmem:[%s2 + $0x34] sm:$0xf]
  %v124 = vld [vmem:[%s2 + $0x38] sm:$0xf]
  %v125 = vld [vmem:[%s2 + $0x3c] sm:$0xf]
  %v126 = vlaneseq
  %v127 = vshrl.u32 %v126, 7
  %v128 = vsub.s32 1, %v127
  %v129 = vrot.slane %v26, %v128
  %v146 = vunpack.c.l.b16 %v110
  %v147 = vunpack.c.l.b16 %v111
  %v148 = vunpack.c.l.b16 %v112
  %v149 = vunpack.c.l.b16 %v113
  %v150 = vunpack.c.l.b16 %v114
  %v151 = vunpack.c.l.b16 %v115
  %v152 = vunpack.c.l.b16 %v116
  %v153 = vunpack.c.l.b16 %v117
  %v154 = vunpack.c.l.b16 %v118
  %v155 = vunpack.c.l.b16 %v119
  %v156 = vunpack.c.l.b16 %v120
  %v157 = vunpack.c.l.b16 %v121
  %v158 = vunpack.c.l.b16 %v122
  %v159 = vunpack.c.l.b16 %v123
  %v160 = vunpack.c.l.b16 %v124
  %v161 = vunpack.c.l.b16 %v125
  %v162 = vpack.c.b16 %v147, %v146
  %v163 = vpack.c.b16 %v149, %v148
  %v164 = vpack.c.b16 %v151, %v150
  %v165 = vpack.c.b16 %v153, %v152
  %v166 = vpack.c.b16 %v155, %v154
  %v167 = vpack.c.b16 %v157, %v156
  %v168 = vpack.c.b16 %v159, %v158
  %v169 = vpack.c.b16 %v161, %v160
  %178 = vmatprep.subr.bf16.mxu0 0
  %179 = vmatpush1.bf16.msra.mxu0 %v169
  %180 = vmatprep.subr.bf16.mxu0 0
  %181 = vmatpush1.bf16.msra.mxu0 %v168
  %182 = vmatprep.subr.bf16.mxu0 0
  %183 = vmatpush1.bf16.msra.mxu0 %v167
  %184 = vmatprep.subr.bf16.mxu0 0
  %185 = vmatpush1.bf16.msra.mxu0 %v166
  %186 = vmatprep.subr.bf16.mxu0 0
  %187 = vmatpush1.bf16.msra.mxu0 %v165
  %188 = vmatprep.subr.bf16.mxu0 0
  %189 = vmatpush1.bf16.msra.mxu0 %v164
  %190 = vmatprep.subr.bf16.mxu0 0
  %191 = vmatpush1.bf16.msra.mxu0 %v163
  %192 = vmatprep.subr.bf16.mxu0 0
  %193 = vmatpush1.bf16.msra.mxu0 %v162
  %194 = vmatprep.subr.bf16.mxu0 0
  %195 = vmatpush2.bf16.msra.mxu0 0
  %196 = vmatprep.subr.bf16.mxu0 0
  %197 = vmatpush2.bf16.msra.mxu0 0
  %198 = vmatprep.subr.bf16.mxu0 0
  %199 = vmatpush2.bf16.msra.mxu0 0
  %200 = vmatprep.subr.bf16.mxu0 0
  %201 = vmatpush2.bf16.msra.mxu0 0
  %202 = vmatprep.subr.bf16.mxu0 0
  %203 = vmatpush2.bf16.msra.mxu0 0
  %204 = vmatprep.subr.bf16.mxu0 0
  %205 = vmatpush2.bf16.msra.mxu0 0
  %206 = vmatprep.subr.bf16.mxu0 0
  %207 = vmatpush2.bf16.msra.mxu0 0
  %208 = vmatprep.subr.bf16.mxu0 0
  %209 = vmatpush2.bf16.msra.mxu0 0
  %210 = vmatprep.mubr.bf16.mxu0 0
  %211 = vmatmul.mubr.bf16.gmra.mxu0 %v109
  %v212 = vpop.f32.mrf.mxu0
  %v213 = vadd.f32 %v129, %v212
  %v214 = vpop.f32.mrf.mxu0
  %v215 = vpop.f32.mrf.mxu0
  %v216 = vpop.f32.mrf.mxu0
  %217 = vdwg.mxu0
  %218 = vst [vmem:[%s7] sm:$0xff] %v213
  %v219 = vxor.u32 %v213, 2147483648
  %v220 = vmul.f32 %v219, 1.442695
  %v221 = vpow.pop %v220
  %v222 = vadd.f32 %v221, 1.0
  %v223 = vrcp.pop %v222
  %v224 = vmul.f32 1.0, %v223
  %v225 = vpack.c.bf16 %v224, %v224
  %v226 = vld [vmem:[%s3] sm:$0xf]
  %v227 = vld [vmem:[%s3 + $0x4] sm:$0xf]
  %v228 = vld [vmem:[%s3 + $0x8] sm:$0xf]
  %v229 = vld [vmem:[%s3 + $0xc] sm:$0xf]
  %v230 = vld [vmem:[%s3 + $0x10] sm:$0xf]
  %v231 = vld [vmem:[%s3 + $0x14] sm:$0xf]
  %v232 = vld [vmem:[%s3 + $0x18] sm:$0xf]
  %v233 = vld [vmem:[%s3 + $0x1c] sm:$0xf]
  %v234 = vld [vmem:[%s3 + $0x20] sm:$0xf]
  %v235 = vld [vmem:[%s3 + $0x24] sm:$0xf]
  %v236 = vld [vmem:[%s3 + $0x28] sm:$0xf]
  %v237 = vld [vmem:[%s3 + $0x2c] sm:$0xf]
  %v238 = vld [vmem:[%s3 + $0x30] sm:$0xf]
  %v239 = vld [vmem:[%s3 + $0x34] sm:$0xf]
  %v240 = vld [vmem:[%s3 + $0x38] sm:$0xf]
  %v241 = vld [vmem:[%s3 + $0x3c] sm:$0xf]
  %v242 = vlaneseq
  %v243 = vshrl.u32 %v242, 7
  %v244 = vsub.s32 2, %v243
  %v245 = vrot.slane %v26, %v244
  %v262 = vunpack.c.l.b16 %v226
  %v263 = vunpack.c.l.b16 %v227
  %v264 = vunpack.c.l.b16 %v228
  %v265 = vunpack.c.l.b16 %v229
  %v266 = vunpack.c.l.b16 %v230
  %v267 = vunpack.c.l.b16 %v231
  %v268 = vunpack.c.l.b16 %v232
  %v269 = vunpack.c.l.b16 %v233
  %v270 = vunpack.c.l.b16 %v234
  %v271 = vunpack.c.l.b16 %v235
  %v272 = vunpack.c.l.b16 %v236
  %v273 = vunpack.c.l.b16 %v237
  %v274 = vunpack.c.l.b16 %v238
  %v275 = vunpack.c.l.b16 %v239
  %v276 = vunpack.c.l.b16 %v240
  %v277 = vunpack.c.l.b16 %v241
  %v278 = vpack.c.b16 %v263, %v262
  %v279 = vpack.c.b16 %v265, %v264
  %v280 = vpack.c.b16 %v267, %v266
  %v281 = vpack.c.b16 %v269, %v268
  %v282 = vpack.c.b16 %v271, %v270
  %v283 = vpack.c.b16 %v273, %v272
  %v284 = vpack.c.b16 %v275, %v274
  %v285 = vpack.c.b16 %v277, %v276
  %294 = vmatprep.subr.bf16.mxu0 0
  %295 = vmatpush1.bf16.msra.mxu0 %v285
  %296 = vmatprep.subr.bf16.mxu0 0
  %297 = vmatpush1.bf16.msra.mxu0 %v284
  %298 = vmatprep.subr.bf16.mxu0 0
  %299 = vmatpush1.bf16.msra.mxu0 %v283
  %300 = vmatprep.subr.bf16.mxu0 0
  %301 = vmatpush1.bf16.msra.mxu0 %v282
  %302 = vmatprep.subr.bf16.mxu0 0
  %303 = vmatpush1.bf16.msra.mxu0 %v281
  %304 = vmatprep.subr.bf16.mxu0 0
  %305 = vmatpush1.bf16.msra.mxu0 %v280
  %306 = vmatprep.subr.bf16.mxu0 0
  %307 = vmatpush1.bf16.msra.mxu0 %v279
  %308 = vmatprep.subr.bf16.mxu0 0
  %309 = vmatpush1.bf16.msra.mxu0 %v278
  %310 = vmatprep.subr.bf16.mxu0 0
  %311 = vmatpush2.bf16.msra.mxu0 0
  %312 = vmatprep.subr.bf16.mxu0 0
  %313 = vmatpush2.bf16.msra.mxu0 0
  %314 = vmatprep.subr.bf16.mxu0 0
  %315 = vmatpush2.bf16.msra.mxu0 0
  %316 = vmatprep.subr.bf16.mxu0 0
  %317 = vmatpush2.bf16.msra.mxu0 0
  %318 = vmatprep.subr.bf16.mxu0 0
  %319 = vmatpush2.bf16.msra.mxu0 0
  %320 = vmatprep.subr.bf16.mxu0 0
  %321 = vmatpush2.bf16.msra.mxu0 0
  %322 = vmatprep.subr.bf16.mxu0 0
  %323 = vmatpush2.bf16.msra.mxu0 0
  %324 = vmatprep.subr.bf16.mxu0 0
  %325 = vmatpush2.bf16.msra.mxu0 0
  %326 = vmatprep.mubr.bf16.mxu0 0
  %327 = vmatmul.mubr.bf16.gmra.mxu0 %v225
  %v328 = vpop.f32.mrf.mxu0
  %v329 = vadd.f32 %v245, %v328
  %v330 = vpop.f32.mrf.mxu0
  %v331 = vpop.f32.mrf.mxu0
  %v332 = vpop.f32.mrf.mxu0
  %333 = vdwg.mxu0
  %v334 = vmax.f32 %v329, 0.0
  %v335 = vpack.c.bf16 %v334, %v334
  %v336 = vld [vmem:[%s4] sm:$0xf]
  %v337 = vld [vmem:[%s4 + $0x4] sm:$0xf]
  %v338 = vld [vmem:[%s4 + $0x8] sm:$0xf]
  %v339 = vld [vmem:[%s4 + $0xc] sm:$0xf]
  %v340 = vld [vmem:[%s4 + $0x10] sm:$0xf]
  %v341 = vld [vmem:[%s4 + $0x14] sm:$0xf]
  %v342 = vld [vmem:[%s4 + $0x18] sm:$0xf]
  %v343 = vld [vmem:[%s4 + $0x1c] sm:$0xf]
  %v344 = vld [vmem:[%s4 + $0x20] sm:$0xf]
  %v345 = vld [vmem:[%s4 + $0x24] sm:$0xf]
  %v346 = vld [vmem:[%s4 + $0x28] sm:$0xf]
  %v347 = vld [vmem:[%s4 + $0x2c] sm:$0xf]
  %v348 = vld [vmem:[%s4 + $0x30] sm:$0xf]
  %v349 = vld [vmem:[%s4 + $0x34] sm:$0xf]
  %v350 = vld [vmem:[%s4 + $0x38] sm:$0xf]
  %v351 = vld [vmem:[%s4 + $0x3c] sm:$0xf]
  %v352 = vlaneseq
  %v353 = vshrl.u32 %v352, 7
  %v354 = vsub.s32 3, %v353
  %v355 = vrot.slane %v26, %v354
  %v372 = vunpack.c.l.b16 %v336
  %v373 = vunpack.c.l.b16 %v337
  %v374 = vunpack.c.l.b16 %v338
  %v375 = vunpack.c.l.b16 %v339
  %v376 = vunpack.c.l.b16 %v340
  %v377 = vunpack.c.l.b16 %v341
  %v378 = vunpack.c.l.b16 %v342
  %v379 = vunpack.c.l.b16 %v343
  %v380 = vunpack.c.l.b16 %v344
  %v381 = vunpack.c.l.b16 %v345
  %v382 = vunpack.c.l.b16 %v346
  %v383 = vunpack.c.l.b16 %v347
  %v384 = vunpack.c.l.b16 %v348
  %v385 = vunpack.c.l.b16 %v349
  %v386 = vunpack.c.l.b16 %v350
  %v387 = vunpack.c.l.b16 %v351
  %v388 = vpack.c.b16 %v373, %v372
  %v389 = vpack.c.b16 %v375, %v374
  %v390 = vpack.c.b16 %v377, %v376
  %v391 = vpack.c.b16 %v379, %v378
  %v392 = vpack.c.b16 %v381, %v380
  %v393 = vpack.c.b16 %v383, %v382
  %v394 = vpack.c.b16 %v385, %v384
  %v395 = vpack.c.b16 %v387, %v386
  %404 = vmatprep.subr.bf16.mxu0 0
  %405 = vmatpush1.bf16.msra.mxu0 %v395
  %406 = vmatprep.subr.bf16.mxu0 0
  %407 = vmatpush1.bf16.msra.mxu0 %v394
  %408 = vmatprep.subr.bf16.mxu0 0
  %409 = vmatpush1.bf16.msra.mxu0 %v393
  %410 = vmatprep.subr.bf16.mxu0 0
  %411 = vmatpush1.bf16.msra.mxu0 %v392
  %412 = vmatprep.subr.bf16.mxu0 0
  %413 = vmatpush1.bf16.msra.mxu0 %v391
  %414 = vmatprep.subr.bf16.mxu0 0
  %415 = vmatpush1.bf16.msra.mxu0 %v390
  %416 = vmatprep.subr.bf16.mxu0 0
  %417 = vmatpush1.bf16.msra.mxu0 %v389
  %418 = vmatprep.subr.bf16.mxu0 0
  %419 = vmatpush1.bf16.msra.mxu0 %v388
  %420 = vmatprep.subr.bf16.mxu0 0
  %421 = vmatpush2.bf16.msra.mxu0 0
  %422 = vmatprep.subr.bf16.mxu0 0
  %423 = vmatpush2.bf16.msra.mxu0 0
  %424 = vmatprep.subr.bf16.mxu0 0
  %425 = vmatpush2.bf16.msra.mxu0 0
  %426 = vmatprep.subr.bf16.mxu0 0
  %427 = vmatpush2.bf16.msra.mxu0 0
  %428 = vmatprep.subr.bf16.mxu0 0
  %429 = vmatpush2.bf16.msra.mxu0 0
  %430 = vmatprep.subr.bf16.mxu0 0
  %431 = vmatpush2.bf16.msra.mxu0 0
  %432 = vmatprep.subr.bf16.mxu0 0
  %433 = vmatpush2.bf16.msra.mxu0 0
  %434 = vmatprep.subr.bf16.mxu0 0
  %435 = vmatpush2.bf16.msra.mxu0 0
  %436 = vmatprep.mubr.bf16.mxu0 0
  %437 = vmatmul.mubr.bf16.gmra.mxu0 %v335
  %v438 = vpop.f32.mrf.mxu0
  %v439 = vadd.f32 %v355, %v438
  %v440 = vpop.f32.mrf.mxu0
  %v441 = vpop.f32.mrf.mxu0
  %v442 = vpop.f32.mrf.mxu0
  %443 = vdwg.mxu0
  %444 = vst [vmem:[%s6] sm:$0xff] %v439
  // Predicated region
  $region26: #{cub_cbm_forward.1} parent=0 // pred_check
    _
  $region27: #{cub_cbm_forward.1} parent=0 // pred_check_branch
    %446 = sbr.rel (0) target = $region29
  $region28: #{cub_cbm_forward.1} parent=0 // pred_region
    _
  $region29: #{cub_cbm_forward.1} parent=0 // pred_fallthru
    _
  // Predicated region
  $region30: #{cub_cbm_forward.1} parent=0 // pred_check
    _
  $region31: #{cub_cbm_forward.1} parent=0 // pred_check_branch
    %448 = sbr.rel (0) target = $region33
  $region32: #{cub_cbm_forward.1} parent=0 // pred_region
    _
  $region33: #{cub_cbm_forward.1} parent=0 // pred_fallthru
    _
  // Predicated region
  $region34: #{cub_cbm_forward.1} parent=0 // pred_check
    _
  $region35: #{cub_cbm_forward.1} parent=0 // pred_check_branch
    %450 = sbr.rel (0) target = $region37
  $region36: #{cub_cbm_forward.1} parent=0 // pred_region
    _
  $region37: #{cub_cbm_forward.1} parent=0 // pred_fallthru
    _
  // Predicated region
  $region38: #{cub_cbm_forward.1} parent=0 // pred_check
    _
  $region39: #{cub_cbm_forward.1} parent=0 // pred_check_branch
    %452 = sbr.rel (0) target = $region41
  $region40: #{cub_cbm_forward.1} parent=0 // pred_region
    _
  $region41: #{cub_cbm_forward.1} parent=0 // pred_fallthru
    _

</llo_original>
